<compile_context>
chip_gen: v5e
topology: v5e:2x2
jax: 0.10.0
libtpu: 0.0.40
codegen_flags: <defaults>
</compile_context>

<pallas_src>
import functools

import jax
import jax.numpy as jnp
from jax import lax
from jax.experimental import pallas as pl
from jax.experimental.pallas import tpu as pltpu

LN_EPS = 1e-5


def _round_up(n, m):
    return ((n + m - 1) // m) * m


def _largest_f_tile(f_total, cap):
    """Largest multiple-of-128 divisor of f_total that is <= cap (f_total % 128 == 0)."""
    t = max(128, (min(cap, f_total) // 128) * 128)
    while f_total % t != 0:
        t -= 128
    return t


def _tpu_caps():
    """Generation-aware (per-core VMEM bytes, MXU edge, is_v5e, is_v6)."""
    kind = ""
    try:
        kind = jax.devices()[0].device_kind.lower()
    except Exception:
        pass
    vmem_cap = None
    try:  # preferred: direct hardware query
        vmem_cap = int(pltpu.get_tpu_info().vmem_capacity_bytes)
    except Exception:
        vmem_cap = None
    is_v5e = ("v5 lite" in kind) or ("v5e" in kind) or ("v5litepod" in kind)
    is_v6 = "v6" in kind
    if vmem_cap is None or vmem_cap <= 0:
        # Conservative fallback: assume v7x's 64 MiB unless we know it's a 128 MiB chip.
        vmem_cap = (128 << 20) if (is_v5e or is_v6 or "v5p" in kind or "v4" in kind) else (64 << 20)
    mxu_edge = 128 if (is_v5e or "v4" in kind or "v5p" in kind) else 256
    return vmem_cap, mxu_edge, is_v5e, is_v6


# ---------------------------------------------------------------------------
# Kernels
# ---------------------------------------------------------------------------

def ffn_resident_kernel(x_ref, w1_ref, b1_ref, w2_ref, b2_ref, g_ref, beta_ref,
                        o_ref):
    """Weight-resident path.  grid = (row_tiles,).

    w1_ref: (D, F) pre-transposed, w2_ref: (F, D) pre-transposed; both are full-array
    blocks with constant index_maps -> fetched once, VMEM-resident for all row tiles.
    """
    x = x_ref[...]                                             # (TM, D)
    xw = x if x.dtype == w1_ref.dtype else x.astype(w1_ref.dtype)

    # linear1 + bias + relu  (MXU, f32 accumulate)
    h = jnp.dot(xw, w1_ref[...], preferred_element_type=jnp.float32)    # (TM, F)
    h = jnp.maximum(h + b1_ref[...].astype(jnp.float32), 0.0)
    # dropout p = 0.0 -> identity

    hw = h if w2_ref.dtype == jnp.float32 else h.astype(w2_ref.dtype)

    # linear2 + bias + residual
    y = jnp.dot(hw, w2_ref[...], preferred_element_type=jnp.float32)    # (TM, D)
    r = x.astype(jnp.float32) + y + b2_ref[...].astype(jnp.float32)

    # LayerNorm (eps = 1e-5), all in f32
    mean = jnp.mean(r, axis=-1, keepdims=True)
    c = r - mean
    var = jnp.mean(c * c, axis=-1, keepdims=True)
    inv = lax.rsqrt(var + LN_EPS)
    o_ref[...] = (c * inv * g_ref[...].astype(jnp.float32)
                  + beta_ref[...].astype(jnp.float32)).astype(o_ref.dtype)


def ffn_streamed_kernel(x_ref, w1_ref, b1_ref, w2_ref, b2_ref, g_ref, beta_ref,
                        o_ref, acc_ref):
    """F-tiled path.  grid = (row_tiles, f_tiles); acc_ref holds linear2 output (f32)."""
    f = pl.program_id(1)
    nf = pl.num_programs(1)

    x = x_ref[...]                                             # (TM, D)
    xw = x if x.dtype == w1_ref.dtype else x.astype(w1_ref.dtype)

    h = jnp.dot(xw, w1_ref[...], preferred_element_type=jnp.float32)    # (TM, TF)
    h = jnp.maximum(h + b1_ref[...].astype(jnp.float32), 0.0)
    hw = h if w2_ref.dtype == jnp.float32 else h.astype(w2_ref.dtype)
    y = jnp.dot(hw, w2_ref[...], preferred_element_type=jnp.float32)    # (TM, D)

    @pl.when(f == 0)
    def _():
        # Fold bias2 into the first partial sum: no zero-fill + read-modify-write.
        acc_ref[...] = y + b2_ref[...].astype(jnp.float32)

    @pl.when(f > 0)
    def _():
        acc_ref[...] += y

    @pl.when(f == nf - 1)
    def _():
        r = x.astype(jnp.float32) + acc_ref[...]
        mean = jnp.mean(r, axis=-1, keepdims=True)
        c = r - mean
        var = jnp.mean(c * c, axis=-1, keepdims=True)
        inv = lax.rsqrt(var + LN_EPS)
        o_ref[...] = (c * inv * g_ref[...].astype(jnp.float32)
                      + beta_ref[...].astype(jnp.float32)).astype(o_ref.dtype)


# ---------------------------------------------------------------------------
# Wrapper
# ---------------------------------------------------------------------------

@functools.partial(jax.jit, static_argnames=("block_rows", "block_f"))
def _ffn_layer_impl(tgt, w1, b1, w2, b2, gamma, beta, *, block_rows, block_f):
    orig_shape = tgt.shape
    d_model = orig_shape[-1]
    dim_ff = w1.shape[0]

    x2d = tgt.reshape(-1, d_model)
    rows = x2d.shape[0]

    isz = jnp.dtype(tgt.dtype).itemsize
    wsz = jnp.dtype(w1.dtype).itemsize
    row_align = 16 if (isz == 2 or wsz == 2) else 8   # bf16 packs 2 rows / sublane

    vmem_cap, mxu_edge, is_v5e, is_v6 = _tpu_caps()
    budget = min(int(vmem_cap * 0.85), vmem_cap - (8 << 20))   # ~54 MiB on v7x, ~108 MiB on v5e/v6e

    # One-time HBM-level transposes -> both in-kernel contractions are plain A @ B
    # (no per-step XLU transposes of weight tiles inside the kernel).
    w1t = jnp.transpose(w1)            # (D, F)
    w2t = jnp.transpose(w2)            # (F, D)

    # Pad F to a lane-aligned multiple of 128.  Zero-padded W1 cols / b1 entries /
    # W2 rows are exact no-ops through ReLU and the second matmul.
    f_pad = _round_up(dim_ff, 128)
    if f_pad != dim_ff:
        w1t = jnp.pad(w1t, ((0, 0), (0, f_pad - dim_ff)))
        w2t = jnp.pad(w2t, ((0, f_pad - dim_ff), (0, 0)))
        b1 = jnp.pad(b1, (0, f_pad - dim_ff))

    D, Fp = d_model, f_pad
    b1_2d = b1.reshape(1, Fp)
    b2_2d = b2.reshape(1, D)
    g_2d = gamma.reshape(1, D)
    be_2d = beta.reshape(1, D)

    # -------------------------------------------------------------- VMEM sizing
    def resident_need(bm):
        return (2 * bm * D * isz                  # x tile (double-buffered)
                + 2 * bm * D * isz                # out tile
                + 2 * 2 * D * Fp * wsz            # W1t + W2t (assume 2 buffers each)
                + 4 * (Fp + 3 * D) * 4            # biases / gamma / beta (generous)
                + bm * Fp * (4 + wsz)             # h (f32) + MXU-dtype copy
                + 3 * bm * D * 4)                 # residual / LayerNorm f32 temps

    def streamed_need(bm, tf, wbuf):
        return (2 * bm * D * isz + 2 * bm * D * isz
                + wbuf * D * tf * wsz + wbuf * tf * D * wsz
                + 4 * (tf + 3 * D) * 4
                + bm * D * 4                      # f32 accumulator scratch
                + bm * tf * (4 + wsz)             # h (f32) + MXU-dtype copy
                + 3 * bm * D * 4)

    # --- weight-resident fast path --------------------------------------------
    if block_rows is not None:
        bm_res_target = max(row_align, _round_up(int(block_rows), row_align))
    else:
        bm_res_target = mxu_edge                  # 128 (v5e) / 256 (v6e, v7x)
    bm = min(bm_res_target, _round_up(rows, row_align))
    while resident_need(bm) > budget and bm > row_align:
        bm = max(row_align, _round_up(bm // 2, row_align))
    resident = resident_need(bm) <= budget

    tf = Fp
    wbuf = 2
    if not resident:
        # --- streamed fallback: large row tiles + F-axis accumulator ----------
        if block_rows is not None:
            bm_str_target = max(row_align, _round_up(int(block_rows), row_align))
        else:
            bm_str_target = 256 if is_v5e else (768 if is_v6 else 512)
            if wsz >= 4:
                bm_str_target *= 2                # f32 weights: double bytes per tile
        bm = min(bm_str_target, _round_up(rows, row_align))
        tf = _largest_f_tile(Fp, int(block_f))
        wbuf = 3 if is_v5e else 2                 # deeper weight stream on v5e
        while streamed_need(bm, tf, wbuf) > budget:
            if tf > 128:
                tf = _largest_f_tile(Fp, tf // 2)
            elif bm > row_align:
                bm = max(row_align, _round_up(bm // 2, row_align))
            else:
                break

    # Megacore: make sure there are >= 2 row tiles when the input allows it, so both
    # TensorCores (v7x) get work along the "parallel" axis.
    if rows >= 2 * row_align and _round_up(rows, bm) // bm < 2:
        bm = _round_up((rows + 1) // 2, row_align)

    padded_rows = _round_up(rows, bm)
    if padded_rows != rows:
        x2d = jnp.pad(x2d, ((0, padded_rows - rows), (0, 0)))

    need = resident_need(bm) if resident else streamed_need(bm, tf, wbuf)
    vmem_limit = int(min(budget, max(int(need * 1.3) + (4 << 20), 32 << 20)))

    # ----------------------------------------------------------------- dispatch
    if resident:
        grid = (padded_rows // bm,)
        out = pl.pallas_call(
            ffn_resident_kernel,
            out_shape=jax.ShapeDtypeStruct((padded_rows, D), tgt.dtype),
            grid_spec=pltpu.PrefetchScalarGridSpec(
                num_scalar_prefetch=0,
                grid=grid,
                in_specs=[
                    pl.BlockSpec((bm, D), lambda i: (i, 0)),     # x tile
                    pl.BlockSpec((D, Fp), lambda i: (0, 0)),     # W1ᵀ, VMEM-resident
                    pl.BlockSpec((1, Fp), lambda i: (0, 0)),     # b1
                    pl.BlockSpec((Fp, D), lambda i: (0, 0)),     # W2ᵀ, VMEM-resident
                    pl.BlockSpec((1, D), lambda i: (0, 0)),      # b2
                    pl.BlockSpec((1, D), lambda i: (0, 0)),      # gamma
                    pl.BlockSpec((1, D), lambda i: (0, 0)),      # beta
                ],
                out_specs=pl.BlockSpec((bm, D), lambda i: (i, 0)),
            ),
            compiler_params=pltpu.CompilerParams(
                dimension_semantics=("parallel",),
                vmem_limit_bytes=vmem_limit,
            ),
        )(x2d, w1t, b1_2d, w2t, b2_2d, g_2d, be_2d)
    else:
        def _w_spec(shape, index_map):
            if is_v5e:
                try:  # deeper weight-stream pipeline on v5e (HBM is the long pole)
                    return pl.BlockSpec(shape, index_map, pipeline_mode=pl.Buffered(3))
                except TypeError:
                    pass
            return pl.BlockSpec(shape, index_map)

        grid = (padded_rows // bm, Fp // tf)
        out = pl.pallas_call(
            ffn_streamed_kernel,
            out_shape=jax.ShapeDtypeStruct((padded_rows, D), tgt.dtype),
            grid_spec=pltpu.PrefetchScalarGridSpec(
                num_scalar_prefetch=0,
                grid=grid,
                in_specs=[
                    pl.BlockSpec((bm, D), lambda i, f: (i, 0)),      # x tile (resident over f)
                    _w_spec((D, tf), lambda i, f: (0, f)),           # W1ᵀ chunk
                    pl.BlockSpec((1, tf), lambda i, f: (0, f)),      # b1 chunk
                    _w_spec((tf, D), lambda i, f: (f, 0)),           # W2ᵀ chunk
                    pl.BlockSpec((1, D), lambda i, f: (0, 0)),       # b2
                    pl.BlockSpec((1, D), lambda i, f: (0, 0)),       # gamma
                    pl.BlockSpec((1, D), lambda i, f: (0, 0)),       # beta
                ],
                out_specs=pl.BlockSpec((bm, D), lambda i, f: (i, 0)),
                scratch_shapes=[pltpu.VMEM((bm, D), jnp.float32)],
            ),
            compiler_params=pltpu.CompilerParams(
                dimension_semantics=("parallel", "arbitrary"),
                vmem_limit_bytes=vmem_limit,
            ),
        )(x2d, w1t, b1_2d, w2t, b2_2d, g_2d, be_2d)

    return out[:rows].reshape(orig_shape)


def ffn_layer(tgt, w1, b1, w2, b2, gamma, beta, *, block_rows=None, block_f=512):
    """tgt: (..., d_model); weights in PyTorch nn.Linear layout:
    w1 (dim_ff, d_model), b1 (dim_ff,), w2 (d_model, dim_ff), b2 (d_model,)."""
    return _ffn_layer_impl(tgt, w1, b1, w2, b2, gamma, beta,
                           block_rows=None if block_rows is None else int(block_rows),
                           block_f=int(block_f))


# ------------------------- reference & demo -------------------------

def xavier_uniform(key, shape, dtype=jnp.float32):
    fan_out, fan_in = shape
    bound = (6.0 / (fan_in + fan_out)) ** 0.5
    return jax.random.uniform(key, shape, dtype, minval=-bound, maxval=bound)


def reference_ffn(tgt, w1, b1, w2, b2, gamma, beta):
    x = tgt.astype(jnp.float32)
    h = jnp.maximum(x @ w1.T.astype(jnp.float32) + b1.astype(jnp.float32), 0.0)
    y = h @ w2.T.astype(jnp.float32) + b2.astype(jnp.float32)
    r = x + y
    mean = jnp.mean(r, axis=-1, keepdims=True)
    var = jnp.mean((r - mean) ** 2, axis=-1, keepdims=True)
    return ((r - mean) * lax.rsqrt(var + LN_EPS)) * gamma.astype(jnp.float32) + beta.astype(jnp.float32)


def _make_params(key, d_model, dim_ff):
    k_w1, k_b1, k_w2, k_b2 = jax.random.split(key, 4)
    w1 = xavier_uniform(k_w1, (dim_ff, d_model))
    b1 = jax.random.uniform(k_b1, (dim_ff,), jnp.float32,
                            minval=-1.0 / d_model ** 0.5, maxval=1.0 / d_model ** 0.5)
    w2 = xavier_uniform(k_w2, (d_model, dim_ff))
    b2 = jax.random.uniform(k_b2, (d_model,), jnp.float32,
                            minval=-1.0 / dim_ff ** 0.5, maxval=1.0 / dim_ff ** 0.5)
    gamma = jnp.ones((d_model,), jnp.float32)
    beta = jnp.zeros((d_model,), jnp.float32)
    return w1, b1, w2, b2, gamma, beta


if __name__ == "__main__":
    key = jax.random.PRNGKey(0)
    k_x, k_p, k_x2, k_p2 = jax.random.split(key, 4)

    # Case 1: lane-aligned small shapes (d_model / dim_ff multiples of 128).
    seq, batch, d_model, dim_ff = 8, 2, 128, 256
    tgt = jax.random.normal(k_x, (seq, batch, d_model), jnp.float32)
    w1, b1, w2, b2, gamma, beta = _make_params(k_p, d_model, dim_ff)
    ref = reference_ffn(tgt, w1, b1, w2, b2, gamma, beta)

    # f32 path (matches the PyTorch module exactly)
    out = jax.block_until_ready(ffn_layer(tgt, w1, b1, w2, b2, gamma, beta))
    assert out.shape == tgt.shape
    assert jnp.allclose(out, ref, atol=1e-4, rtol=1e-4), "f32 mismatch vs reference"

    # bf16 weights/activations fed natively to the MXU (f32 accumulate + f32 epilogue).
    # Note: h is deliberately cast f32->bf16 between the two matmuls (MXU-native), hence loose tol.
    out_bf16 = jax.block_until_ready(
        ffn_layer(tgt.astype(jnp.bfloat16),
                  w1.astype(jnp.bfloat16), b1.astype(jnp.bfloat16),
                  w2.astype(jnp.bfloat16), b2.astype(jnp.bfloat16),
                  gamma.astype(jnp.bfloat16), beta.astype(jnp.bfloat16)))
    assert out_bf16.shape == tgt.shape
    assert jnp.allclose(out_bf16.astype(jnp.float32), ref, atol=1e-1, rtol=1e-1), \
        "bf16 mismatch vs reference"

    # Case 2: dim_ff not a multiple of 128 (exercises the F zero-padding path).
    d2, f2 = 128, 320
    tgt2 = jax.random.normal(k_x2, (4, 2, d2), jnp.float32)
    w1b, b1b, w2b, b2b, gb, bb = _make_params(k_p2, d2, f2)
    ref2 = reference_ffn(tgt2, w1b, b1b, w2b, b2b, gb, bb)
    out2 = jax.block_until_ready(ffn_layer(tgt2, w1b, b1b, w2b, b2b, gb, bb))
    assert out2.shape == tgt2.shape
    assert jnp.allclose(out2, ref2, atol=1e-4, rtol=1e-4), "padded-F mismatch vs reference"

    print("KERNEL_OK")
</pallas_src>

<mosaic_0001>
module attributes {stable_mosaic.version = 11 : i64} {
  func.func @ffn_resident_kernel(%arg0: i32, %arg1: memref<8x128xf32, #tpu.memory_space<vmem>>, %arg2: memref<128x256xf32, #tpu.memory_space<vmem>>, %arg3: memref<1x256xf32, #tpu.memory_space<vmem>>, %arg4: memref<256x128xf32, #tpu.memory_space<vmem>>, %arg5: memref<1x128xf32, #tpu.memory_space<vmem>>, %arg6: memref<1x128xf32, #tpu.memory_space<vmem>>, %arg7: memref<1x128xf32, #tpu.memory_space<vmem>>, %arg8: memref<8x128xf32, #tpu.memory_space<vmem>>) attributes {dimension_semantics = [#tpu.dimension_semantics<parallel>], iteration_bounds = array<i64: 2>, scalar_prefetch = 0 : i64, scratch_operands = 0 : i64, tpu.core_type = #tpu.core_type<tc>, window_params = [{transform_indices = @transform_0, window_bounds = array<i64: 8, 128>}, {pipeline_mode = #tpu.pipeline_mode<synchronous>, transform_indices = @transform_1, window_bounds = array<i64: 128, 256>}, {pipeline_mode = #tpu.pipeline_mode<synchronous>, transform_indices = @transform_2, window_bounds = array<i64: 1, 256>}, {pipeline_mode = #tpu.pipeline_mode<synchronous>, transform_indices = @transform_3, window_bounds = array<i64: 256, 128>}, {pipeline_mode = #tpu.pipeline_mode<synchronous>, transform_indices = @transform_4, window_bounds = array<i64: 1, 128>}, {pipeline_mode = #tpu.pipeline_mode<synchronous>, transform_indices = @transform_5, window_bounds = array<i64: 1, 128>}, {pipeline_mode = #tpu.pipeline_mode<synchronous>, transform_indices = @transform_6, window_bounds = array<i64: 1, 128>}, {transform_indices = @transform_7, window_bounds = array<i64: 8, 128>}]} {
    %c0 = arith.constant 0 : index
    %c0_0 = arith.constant 0 : index
    %0 = vector.load %arg1[%c0, %c0_0] : memref<8x128xf32, #tpu.memory_space<vmem>>, vector<8x128xf32>
    %c0_1 = arith.constant 0 : index
    %c0_2 = arith.constant 0 : index
    %1 = vector.load %arg2[%c0_1, %c0_2] : memref<128x256xf32, #tpu.memory_space<vmem>>, vector<128x256xf32>
    %cst = arith.constant dense<0.000000e+00> : vector<8x256xf32>
    %2 = tpu.matmul %0, %1, %cst {dimension_numbers = #tpu.dot_dimension_numbers<[1], [0], [0], [1], [0, 0, 1, 1], [], []>} : vector<8x128xf32>, vector<128x256xf32>, vector<8x256xf32> -> vector<8x256xf32>
    %c0_3 = arith.constant 0 : index
    %c0_4 = arith.constant 0 : index
    %3 = vector.load %arg3[%c0_3, %c0_4] : memref<1x256xf32, #tpu.memory_space<vmem>>, vector<1x256xf32>
    %4 = vector.broadcast %3 : vector<1x256xf32> to vector<8x256xf32>
    %5 = arith.addf %2, %4 : vector<8x256xf32>
    %cst_5 = arith.constant 0.000000e+00 : f32
    %6 = vector.broadcast %cst_5 : f32 to vector<8x256xf32>
    %7 = arith.maximumf %5, %6 : vector<8x256xf32>
    %c0_6 = arith.constant 0 : index
    %c0_7 = arith.constant 0 : index
    %8 = vector.load %arg4[%c0_6, %c0_7] : memref<256x128xf32, #tpu.memory_space<vmem>>, vector<256x128xf32>
    %cst_8 = arith.constant dense<0.000000e+00> : vector<8x128xf32>
    %9 = tpu.matmul %7, %8, %cst_8 {dimension_numbers = #tpu.dot_dimension_numbers<[1], [0], [0], [1], [0, 0, 1, 1], [], []>} : vector<8x256xf32>, vector<256x128xf32>, vector<8x128xf32> -> vector<8x128xf32>
    %10 = arith.addf %0, %9 : vector<8x128xf32>
    %c0_9 = arith.constant 0 : index
    %c0_10 = arith.constant 0 : index
    %11 = vector.load %arg5[%c0_9, %c0_10] : memref<1x128xf32, #tpu.memory_space<vmem>>, vector<1x128xf32>
    %12 = vector.broadcast %11 : vector<1x128xf32> to vector<8x128xf32>
    %13 = arith.addf %10, %12 : vector<8x128xf32>
    %cst_11 = arith.constant dense<0.000000e+00> : vector<8xf32>
    %14 = vector.multi_reduction <add>, %13, %cst_11 [1] : vector<8x128xf32> to vector<8xf32>
    %15 = vector.shape_cast %14 : vector<8xf32> to vector<8x1xf32>
    %cst_12 = arith.constant 1.280000e+02 : f32
    %16 = vector.broadcast %cst_12 : f32 to vector<8x1xf32>
    %17 = arith.divf %15, %16 : vector<8x1xf32>
    %18 = vector.broadcast %17 : vector<8x1xf32> to vector<8x128xf32>
    %19 = arith.subf %13, %18 : vector<8x128xf32>
    %20 = arith.mulf %19, %19 : vector<8x128xf32>
    %cst_13 = arith.constant dense<0.000000e+00> : vector<8xf32>
    %21 = vector.multi_reduction <add>, %20, %cst_13 [1] : vector<8x128xf32> to vector<8xf32>
    %22 = vector.shape_cast %21 : vector<8xf32> to vector<8x1xf32>
    %cst_14 = arith.constant 1.280000e+02 : f32
    %23 = vector.broadcast %cst_14 : f32 to vector<8x1xf32>
    %24 = arith.divf %22, %23 : vector<8x1xf32>
    %cst_15 = arith.constant 9.99999974E-6 : f32
    %25 = vector.broadcast %cst_15 : f32 to vector<8x1xf32>
    %26 = arith.addf %24, %25 : vector<8x1xf32>
    %27 = math.rsqrt %26 : vector<8x1xf32>
    %28 = vector.broadcast %27 : vector<8x1xf32> to vector<8x128xf32>
    %29 = arith.mulf %19, %28 : vector<8x128xf32>
    %c0_16 = arith.constant 0 : index
    %c0_17 = arith.constant 0 : index
    %30 = vector.load %arg6[%c0_16, %c0_17] : memref<1x128xf32, #tpu.memory_space<vmem>>, vector<1x128xf32>
    %31 = vector.broadcast %30 : vector<1x128xf32> to vector<8x128xf32>
    %32 = arith.mulf %29, %31 : vector<8x128xf32>
    %c0_18 = arith.constant 0 : index
    %c0_19 = arith.constant 0 : index
    %33 = vector.load %arg7[%c0_18, %c0_19] : memref<1x128xf32, #tpu.memory_space<vmem>>, vector<1x128xf32>
    %34 = vector.broadcast %33 : vector<1x128xf32> to vector<8x128xf32>
    %35 = arith.addf %32, %34 : vector<8x128xf32>
    %c0_20 = arith.constant 0 : index
    %c0_21 = arith.constant 0 : index
    %36 = vector.load %arg8[%c0_20, %c0_21] : memref<8x128xf32, #tpu.memory_space<vmem>>, vector<8x128xf32>
    tpu.vector_store %arg8[%c0_20, %c0_21], %35 {strides = array<i32>} : memref<8x128xf32, #tpu.memory_space<vmem>>, vector<8x128xf32>,
    return
  }
  func.func @transform_0(%arg0: i32) -> (i32, i32) {
    %c0_i32 = arith.constant 0 : i32
    %c0_i32_0 = arith.constant 0 : i32
    return %arg0, %c0_i32 : i32, i32
  }
  func.func @transform_1(%arg0: i32) -> (i32, i32) {
    %c0_i32 = arith.constant 0 : i32
    %c0_i32_0 = arith.constant 0 : i32
    %c0_i32_1 = arith.constant 0 : i32
    return %c0_i32, %c0_i32_0 : i32, i32
  }
  func.func @transform_2(%arg0: i32) -> (i32, i32) {
    %c0_i32 = arith.constant 0 : i32
    %c0_i32_0 = arith.constant 0 : i32
    %c0_i32_1 = arith.constant 0 : i32
    return %c0_i32, %c0_i32_0 : i32, i32
  }
  func.func @transform_3(%arg0: i32) -> (i32, i32) {
    %c0_i32 = arith.constant 0 : i32
    %c0_i32_0 = arith.constant 0 : i32
    %c0_i32_1 = arith.constant 0 : i32
    return %c0_i32, %c0_i32_0 : i32, i32
  }
  func.func @transform_4(%arg0: i32) -> (i32, i32) {
    %c0_i32 = arith.constant 0 : i32
    %c0_i32_0 = arith.constant 0 : i32
    %c0_i32_1 = arith.constant 0 : i32
    return %c0_i32, %c0_i32_0 : i32, i32
  }
  func.func @transform_5(%arg0: i32) -> (i32, i32) {
    %c0_i32 = arith.constant 0 : i32
    %c0_i32_0 = arith.constant 0 : i32
    %c0_i32_1 = arith.constant 0 : i32
    return %c0_i32, %c0_i32_0 : i32, i32
  }
  func.func @transform_6(%arg0: i32) -> (i32, i32) {
    %c0_i32 = arith.constant 0 : i32
    %c0_i32_0 = arith.constant 0 : i32
    %c0_i32_1 = arith.constant 0 : i32
    return %c0_i32, %c0_i32_0 : i32, i32
  }
  func.func @transform_7(%arg0: i32) -> (i32, i32) {
    %c0_i32 = arith.constant 0 : i32
    %c0_i32_0 = arith.constant 0 : i32
    return %arg0, %c0_i32 : i32, i32
  }
}

</mosaic_0001>

<llo_original>
// kernel: _ffn_layer_impl.1
$region0: #{_ffn_layer_impl.1}
  #allocation0 [shape = 'u32[]', space=smem, size = 0x4, offset = 0x4, fixed_abs, tag = 'smem constant byte address 0x4 - core index']
  #allocation1 [shape = 'u32[72,128]{1,0:T(1,128)}', space=vmem, size = 0x9000, scoped, tag = 'internal scratch']
  %s0 = inlined_call_operand.vmem [shape: f32[16,128], index: 0, kind: input, shape index: {}]
  %s1 = inlined_call_operand.vmem [shape: f32[128,256], index: 1, kind: input, shape index: {}]
  %s2 = inlined_call_operand.vmem [shape: f32[1,256], index: 2, kind: input, shape index: {}]
  %s3 = inlined_call_operand.vmem [shape: f32[256,128], index: 3, kind: input, shape index: {}]
  %s4 = inlined_call_operand.vmem [shape: f32[1,128], index: 4, kind: input, shape index: {}]
  %s5 = inlined_call_operand.vmem [shape: f32[1,128], index: 5, kind: input, shape index: {}]
  %s6 = inlined_call_operand.vmem [shape: f32[1,128], index: 6, kind: input, shape index: {}]
  %s7 = inlined_call_operand.hbm [shape: f32[16,128], index: 7, kind: output, shape index: {}]
  %s8 = sld [smem:[#allocation0]]
  $region61: #{_ffn_layer_impl.1} parent=0
    _
  %s10 = ssub.s32 1, %s8
  %s11 = scalar_select 0, %s10, %s8
  $region1: #{_ffn_layer_impl.1} parent=0
    #allocation2 [shape = 'u8[8192]{0}', space=vmem, size = 0x2000, scoped, tag = 'output window, operand 0']
    #allocation3 [shape = 's32[2]{0}', space=sflag, size = 0x8, scoped, tag = 'scoped memory for _ffn_layer_impl.1']
    %12 = vsyncpa [#allocation3], 0
    %s13 = scalar_lea.sflag [#allocation3], 1
    %14 = vsyncpa %s13, 0
    loop: start=0, step=1, limit=4
    $region2: #{_ffn_layer_impl.1} parent=1 // loop_pre_header
      _
    $region3: #{_ffn_layer_impl.1} parent=1 // loop_header
      %s16 = sphi 0, %s20
      %p17 = scmp.ge.s32.totalorder %s16, 4
      %s26 = sphi 0, %s28
      %s29 = sphi 0, %s26
      %s30 = sphi 0, %s29
      %s46 = sphi 0, %s30
      %s50 = sphi 0, %s50
      %s52 = sphi 0, %s50
      %s53 = sphi 0, %s52
      %s67 = sphi 0, %s53
      %s71 = sphi 0, %s71
      %s73 = sphi 0, %s71
      %s74 = sphi 0, %s73
      %s88 = sphi 0, %s74
      %s92 = sphi 0, %s92
      %s94 = sphi 0, %s92
      %s95 = sphi 0, %s94
      %s109 = sphi 0, %s95
      %s113 = sphi 0, %s113
      %s115 = sphi 0, %s113
      %s116 = sphi 0, %s115
      %s130 = sphi 0, %s116
      %s134 = sphi 0, %s134
      %s136 = sphi 0, %s134
      %s137 = sphi 0, %s136
      %s151 = sphi 0, %s137
      %s155 = sphi 0, %s155
      %s157 = sphi 0, %s155
      %s158 = sphi 0, %s157
      %s172 = sphi 0, %s158
      %s178 = sphi 0, %s180
      %s181 = sphi 0, %s178
      %s182 = sphi 0, %s181
      %s198 = sphi 0, %s182
    $region4: #{_ffn_layer_impl.1} parent=1 // loop_header_branch
      %19 = sbr.rel (%p17) target = $region8
    $region5: #{_ffn_layer_impl.1} parent=1 // loop_body
      %s21 = ssub.s32 %s16, 1
      %s22 = ssub.s32 %s16, 2
      %s23 = sadd.s32 %s16, 1
      %s24 = ssub.s32 %s16, %s23
      %p25 = scmp.eq.s32.totalorder %s24, 0
      %s27 = sadd.s32 %s26, 1
      %s28 = scalar_select %p25, %s26, %s27
      %p31 = pneg %p25
      %p32 = scmp.eq.s32.totalorder %s16, 1
      %p33 = por %p31, %p32
      %p34 = scmp.ne.s32.totalorder %s26, %s29
      %p35 = scmp.eq.s32.totalorder %s16, 0
      %p36 = por %p34, %p35
      %p37 = scmp.ne.s32.totalorder %s26, %s29
      %p38 = scmp.eq.s32.totalorder %s21, 1
      %p39 = por %p37, %p38
      %p40 = scmp.ne.s32.totalorder %s29, %s30
      %p41 = scmp.eq.s32.totalorder %s21, 0
      %p42 = por %p40, %p41
      %p43 = scmp.ne.s32.totalorder %s29, %s30
      %p44 = scmp.eq.s32.totalorder %s22, 1
      %p45 = por %p43, %p44
      %p47 = scmp.ne.s32.totalorder %s30, %s46
      %p48 = scmp.eq.s32.totalorder %s22, 0
      %p49 = por %p47, %p48
      %s51 = sadd.s32 %s50, 1
      %p54 = scmp.eq.s32.totalorder %s16, 1
      %p55 = scmp.ne.s32.totalorder %s50, %s52
      %p56 = scmp.eq.s32.totalorder %s16, 0
      %p57 = por %p55, %p56
      %p58 = scmp.ne.s32.totalorder %s50, %s52
      %p59 = scmp.eq.s32.totalorder %s21, 1
      %p60 = por %p58, %p59
      %p61 = scmp.ne.s32.totalorder %s52, %s53
      %p62 = scmp.eq.s32.totalorder %s21, 0
      %p63 = por %p61, %p62
      %p64 = scmp.ne.s32.totalorder %s52, %s53
      %p65 = scmp.eq.s32.totalorder %s22, 1
      %p66 = por %p64, %p65
      %p68 = scmp.ne.s32.totalorder %s53, %s67
      %p69 = scmp.eq.s32.totalorder %s22, 0
      %p70 = por %p68, %p69
      %s72 = sadd.s32 %s71, 1
      %p75 = scmp.eq.s32.totalorder %s16, 1
      %p76 = scmp.ne.s32.totalorder %s71, %s73
      %p77 = scmp.eq.s32.totalorder %s16, 0
      %p78 = por %p76, %p77
      %p79 = scmp.ne.s32.totalorder %s71, %s73
      %p80 = scmp.eq.s32.totalorder %s21, 1
      %p81 = por %p79, %p80
      %p82 = scmp.ne.s32.totalorder %s73, %s74
      %p83 = scmp.eq.s32.totalorder %s21, 0
      %p84 = por %p82, %p83
      %p85 = scmp.ne.s32.totalorder %s73, %s74
      %p86 = scmp.eq.s32.totalorder %s22, 1
      %p87 = por %p85, %p86
      %p89 = scmp.ne.s32.totalorder %s74, %s88
      %p90 = scmp.eq.s32.totalorder %s22, 0
      %p91 = por %p89, %p90
      %s93 = sadd.s32 %s92, 1
      %p96 = scmp.eq.s32.totalorder %s16, 1
      %p97 = scmp.ne.s32.totalorder %s92, %s94
      %p98 = scmp.eq.s32.totalorder %s16, 0
      %p99 = por %p97, %p98
      %p100 = scmp.ne.s32.totalorder %s92, %s94
      %p101 = scmp.eq.s32.totalorder %s21, 1
      %p102 = por %p100, %p101
      %p103 = scmp.ne.s32.totalorder %s94, %s95
      %p104 = scmp.eq.s32.totalorder %s21, 0
      %p105 = por %p103, %p104
      %p106 = scmp.ne.s32.totalorder %s94, %s95
      %p107 = scmp.eq.s32.totalorder %s22, 1
      %p108 = por %p106, %p107
      %p110 = scmp.ne.s32.totalorder %s95, %s109
      %p111 = scmp.eq.s32.totalorder %s22, 0
      %p112 = por %p110, %p111
      %s114 = sadd.s32 %s113, 1
      %p117 = scmp.eq.s32.totalorder %s16, 1
      %p118 = scmp.ne.s32.totalorder %s113, %s115
      %p119 = scmp.eq.s32.totalorder %s16, 0
      %p120 = por %p118, %p119
      %p121 = scmp.ne.s32.totalorder %s113, %s115
      %p122 = scmp.eq.s32.totalorder %s21, 1
      %p123 = por %p121, %p122
      %p124 = scmp.ne.s32.totalorder %s115, %s116
      %p125 = scmp.eq.s32.totalorder %s21, 0
      %p126 = por %p124, %p125
      %p127 = scmp.ne.s32.totalorder %s115, %s116
      %p128 = scmp.eq.s32.totalorder %s22, 1
      %p129 = por %p127, %p128
      %p131 = scmp.ne.s32.totalorder %s116, %s130
      %p132 = scmp.eq.s32.totalorder %s22, 0
      %p133 = por %p131, %p132
      %s135 = sadd.s32 %s134, 1
      %p138 = scmp.eq.s32.totalorder %s16, 1
      %p139 = scmp.ne.s32.totalorder %s134, %s136
      %p140 = scmp.eq.s32.totalorder %s16, 0
      %p141 = por %p139, %p140
      %p142 = scmp.ne.s32.totalorder %s134, %s136
      %p143 = scmp.eq.s32.totalorder %s21, 1
      %p144 = por %p142, %p143
      %p145 = scmp.ne.s32.totalorder %s136, %s137
      %p146 = scmp.eq.s32.totalorder %s21, 0
      %p147 = por %p145, %p146
      %p148 = scmp.ne.s32.totalorder %s136, %s137
      %p149 = scmp.eq.s32.totalorder %s22, 1
      %p150 = por %p148, %p149
      %p152 = scmp.ne.s32.totalorder %s137, %s151
      %p153 = scmp.eq.s32.totalorder %s22, 0
      %p154 = por %p152, %p153
      %s156 = sadd.s32 %s155, 1
      %p159 = scmp.eq.s32.totalorder %s16, 1
      %p160 = scmp.ne.s32.totalorder %s155, %s157
      %p161 = scmp.eq.s32.totalorder %s16, 0
      %p162 = por %p160, %p161
      %p163 = scmp.ne.s32.totalorder %s155, %s157
      %p164 = scmp.eq.s32.totalorder %s21, 1
      %p165 = por %p163, %p164
      %p166 = scmp.ne.s32.totalorder %s157, %s158
      %p167 = scmp.eq.s32.totalorder %s21, 0
      %p168 = por %p166, %p167
      %p169 = scmp.ne.s32.totalorder %s157, %s158
      %p170 = scmp.eq.s32.totalorder %s22, 1
      %p171 = por %p169, %p170
      %p173 = scmp.ne.s32.totalorder %s158, %s172
      %p174 = scmp.eq.s32.totalorder %s22, 0
      %p175 = por %p173, %p174
      %s176 = ssub.s32 %s16, %s23
      %p177 = scmp.eq.s32.totalorder %s176, 0
      %s179 = sadd.s32 %s178, 1
      %s180 = scalar_select %p177, %s178, %s179
      %p183 = pneg %p177
      %p184 = scmp.eq.s32.totalorder %s16, 1
      %p185 = por %p183, %p184
      %p186 = scmp.ne.s32.totalorder %s178, %s181
      %p187 = scmp.eq.s32.totalorder %s16, 0
      %p188 = por %p186, %p187
      %p189 = scmp.ne.s32.totalorder %s178, %s181
      %p190 = scmp.eq.s32.totalorder %s21, 1
      %p191 = por %p189, %p190
      %p192 = scmp.ne.s32.totalorder %s181, %s182
      %p193 = scmp.eq.s32.totalorder %s21, 0
      %p194 = por %p192, %p193
      %p195 = scmp.ne.s32.totalorder %s181, %s182
      %p196 = scmp.eq.s32.totalorder %s22, 1
      %p197 = por %p195, %p196
      %p199 = scmp.ne.s32.totalorder %s182, %s198
      %p200 = scmp.eq.s32.totalorder %s22, 0
      %p201 = por %p199, %p200
      %p202 = scmp.le.s32.totalorder 1, %s16
      %p203 = scmp.lt.s32.totalorder %s16, 3
      %p204 = pnand %p202, %p203
      %p205 = pneg %p204
      // Predicated region
      $region9: #{_ffn_layer_impl.1} parent=5 // pred_check
        _
      $region10: #{_ffn_layer_impl.1} parent=5 // pred_check_branch
        %207 = sbr.rel (%p204) target = $region12
      $region11: #{_ffn_layer_impl.1} parent=5 // pred_region
        %s208 = ssub.s32 %s16, 1
        // Predicated region
        $region13: #{_ffn_layer_impl.1} parent=11 // pred_check
          %p209 = pneg %p63
        $region14: #{_ffn_layer_impl.1} parent=11 // pred_check_branch
          %211 = sbr.rel (%p209) target = $region16
        $region15: #{_ffn_layer_impl.1} parent=11 // pred_region
          _
        $region16: #{_ffn_layer_impl.1} parent=11 // pred_fallthru
          _
        // Predicated region
        $region17: #{_ffn_layer_impl.1} parent=11 // pred_check
          %p212 = pneg %p84
        $region18: #{_ffn_layer_impl.1} parent=11 // pred_check_branch
          %214 = sbr.rel (%p212) target = $region20
        $region19: #{_ffn_layer_impl.1} parent=11 // pred_region
          _
        $region20: #{_ffn_layer_impl.1} parent=11 // pred_fallthru
          _
        // Predicated region
        $region21: #{_ffn_layer_impl.1} parent=11 // pred_check
          %p215 = pneg %p105
        $region22: #{_ffn_layer_impl.1} parent=11 // pred_check_branch
          %217 = sbr.rel (%p215) target = $region24
        $region23: #{_ffn_layer_impl.1} parent=11 // pred_region
          _
        $region24: #{_ffn_layer_impl.1} parent=11 // pred_fallthru
          _
        // Predicated region
        $region25: #{_ffn_layer_impl.1} parent=11 // pred_check
          %p218 = pneg %p126
        $region26: #{_ffn_layer_impl.1} parent=11 // pred_check_branch
          %220 = sbr.rel (%p218) target = $region28
        $region27: #{_ffn_layer_impl.1} parent=11 // pred_region
          _
        $region28: #{_ffn_layer_impl.1} parent=11 // pred_fallthru
          _
        // Predicated region
        $region29: #{_ffn_layer_impl.1} parent=11 // pred_check
          %p221 = pneg %p147
        $region30: #{_ffn_layer_impl.1} parent=11 // pred_check_branch
          %223 = sbr.rel (%p221) target = $region32
        $region31: #{_ffn_layer_impl.1} parent=11 // pred_region
          _
        $region32: #{_ffn_layer_impl.1} parent=11 // pred_fallthru
          _
        // Predicated region
        $region33: #{_ffn_layer_impl.1} parent=11 // pred_check
          %p224 = pneg %p168
        $region34: #{_ffn_layer_impl.1} parent=11 // pred_check_branch
          %226 = sbr.rel (%p224) target = $region36
        $region35: #{_ffn_layer_impl.1} parent=11 // pred_region
          _
        $region36: #{_ffn_layer_impl.1} parent=11 // pred_fallthru
          _
      $region12: #{_ffn_layer_impl.1} parent=5 // pred_fallthru
        _
      %p227 = scmp.lt.s32.totalorder %s16, 2
      // Predicated region
      $region37: #{_ffn_layer_impl.1} parent=5 // pred_check
        %p228 = pneg %p227
      $region38: #{_ffn_layer_impl.1} parent=5 // pred_check_branch
        %230 = sbr.rel (%p228) target = $region40
      $region39: #{_ffn_layer_impl.1} parent=5 // pred_region
        // Predicated region
        $region41: #{_ffn_layer_impl.1} parent=39 // pred_check
          %p231 = pneg %p36
        $region42: #{_ffn_layer_impl.1} parent=39 // pred_check_branch
          %233 = sbr.rel (%p231) target = $region44
        $region43: #{_ffn_layer_impl.1} parent=39 // pred_region
          %p234 = scmp.lt.s32.totalorder %s16, 1
          %s235 = scalar_select %p234, %s16, 1
          %s236 = smul.addr %s235, 8
          %s237 = scalar_lea.vmem %s0, %s236
        $region44: #{_ffn_layer_impl.1} parent=39 // pred_fallthru
          _
      $region40: #{_ffn_layer_impl.1} parent=5 // pred_fallthru
        _
      %p238 = scmp.le.s32.totalorder 1, %s16
      %p239 = scmp.lt.s32.totalorder %s16, 3
      %p240 = pnand %p238, %p239
      %p241 = pneg %p240
      // Predicated region
      $region45: #{_ffn_layer_impl.1} parent=5 // pred_check
        _
      $region46: #{_ffn_layer_impl.1} parent=5 // pred_check_branch
        %243 = sbr.rel (%p240) target = $region48
      $region47: #{_ffn_layer_impl.1} parent=5 // pred_region
        %s244 = ssub.s32 %s16, 1
        %p245 = scmp.lt.s32.totalorder %s21, 1
        %s246 = scalar_select %p245, %s21, 1
        %s247 = smul.addr %s246, 8
        %s248 = scalar_lea.vmem %s0, %s247
        %p249 = pneg %p42
        %p250 = pneg %p39
        %p251 = pneg %p63
        %p252 = pneg %p60
        %p253 = pneg %p84
        %p254 = pneg %p81
        %p255 = pneg %p105
        %p256 = pneg %p102
        %p257 = pneg %p126
        %p258 = pneg %p123
        %p259 = pneg %p147
        %p260 = pneg %p144
        %p261 = pneg %p168
        %p262 = pneg %p165
        %p263 = pneg %p194
        %p264 = pneg %p191
        %s265 = sand.u32 %s181, 1
        %s266 = scalar_lea.sflag [#allocation3], %s265
        %s267 = sand.u32 %s181, 1
        %s268 = smul.addr %s267, 8
        %s269 = scalar_lea.vmem [#allocation2], %s268
        %p270 = scmp.lt.s32.totalorder %s21, 1
        %s271 = scalar_select %p270, %s21, 1
        %s272 = smul.addr %s271, 8
        %s273 = scalar_lea.vmem %s0, %s272
        %v274 = vld [vmem:[%s273] sm:$0xff]
        %v275 = vld [vmem:[%s1] sm:$0xff]
        %v276 = vld [vmem:[%s1 + $0x8] sm:$0xff]
        %v277 = vld [vmem:[%s1 + $0x10] sm:$0xff]
        %v278 = vld [vmem:[%s1 + $0x18] sm:$0xff]
        %v279 = vld [vmem:[%s1 + $0x20] sm:$0xff]
        %v280 = vld [vmem:[%s1 + $0x28] sm:$0xff]
        %v281 = vld [vmem:[%s1 + $0x30] sm:$0xff]
        %v282 = vld [vmem:[%s1 + $0x38] sm:$0xff]
        %v283 = vld [vmem:[%s1 + $0x40] sm:$0xff]
        %v284 = vld [vmem:[%s1 + $0x48] sm:$0xff]
        %v285 = vld [vmem:[%s1 + $0x50] sm:$0xff]
        %v286 = vld [vmem:[%s1 + $0x58] sm:$0xff]
        %v287 = vld [vmem:[%s1 + $0x60] sm:$0xff]
        %v288 = vld [vmem:[%s1 + $0x68] sm:$0xff]
        %v289 = vld [vmem:[%s1 + $0x70] sm:$0xff]
        %v290 = vld [vmem:[%s1 + $0x78] sm:$0xff]
        %v291 = vld [vmem:[%s1 + $0x80] sm:$0xff]
        %v292 = vld [vmem:[%s1 + $0x88] sm:$0xff]
        %v293 = vld [vmem:[%s1 + $0x90] sm:$0xff]
        %v294 = vld [vmem:[%s1 + $0x98] sm:$0xff]
        %v295 = vld [vmem:[%s1 + $0xa0] sm:$0xff]
        %v296 = vld [vmem:[%s1 + $0xa8] sm:$0xff]
        %v297 = vld [vmem:[%s1 + $0xb0] sm:$0xff]
        %v298 = vld [vmem:[%s1 + $0xb8] sm:$0xff]
        %v299 = vld [vmem:[%s1 + $0xc0] sm:$0xff]
        %v300 = vld [vmem:[%s1 + $0xc8] sm:$0xff]
        %v301 = vld [vmem:[%s1 + $0xd0] sm:$0xff]
        %v302 = vld [vmem:[%s1 + $0xd8] sm:$0xff]
        %v303 = vld [vmem:[%s1 + $0xe0] sm:$0xff]
        %v304 = vld [vmem:[%s1 + $0xe8] sm:$0xff]
        %v305 = vld [vmem:[%s1 + $0xf0] sm:$0xff]
        %v306 = vld [vmem:[%s1 + $0xf8] sm:$0xff]
        %v307 = vld [vmem:[%s2] sm:$0x3]
        %v309 = vperm.slane %v307, 0
        %v310 = vperm.slane %v307, 1
        %313 = vmatpush.msra.mxu0 %v305
        %314 = vmatpush.msra.mxu0 %v303
        %315 = vmatpush.msra.mxu0 %v301
        %316 = vmatpush.msra.mxu0 %v299
        %317 = vmatpush.msra.mxu0 %v297
        %318 = vmatpush.msra.mxu0 %v295
        %319 = vmatpush.msra.mxu0 %v293
        %320 = vmatpush.msra.mxu0 %v291
        %321 = vmatpush.msra.mxu0 %v289
        %322 = vmatpush.msra.mxu0 %v287
        %323 = vmatpush.msra.mxu0 %v285
        %324 = vmatpush.msra.mxu0 %v283
        %325 = vmatpush.msra.mxu0 %v281
        %326 = vmatpush.msra.mxu0 %v279
        %327 = vmatpush.msra.mxu0 %v277
        %328 = vmatpush.msra.mxu0 %v275
        %329 = vmatmul.f32.gmra.mxu0 %v274
        %v330 = vpop.f32.mrf.mxu0
        %v331 = vadd.f32 %v309, %v330
        %332 = vdwg.mxu0
        %333 = vmatpush.msra.mxu0 %v306
        %334 = vmatpush.msra.mxu0 %v304
        %335 = vmatpush.msra.mxu0 %v302
        %336 = vmatpush.msra.mxu0 %v300
        %337 = vmatpush.msra.mxu0 %v298
        %338 = vmatpush.msra.mxu0 %v296
        %339 = vmatpush.msra.mxu0 %v294
        %340 = vmatpush.msra.mxu0 %v292
        %341 = vmatpush.msra.mxu0 %v290
        %342 = vmatpush.msra.mxu0 %v288
        %343 = vmatpush.msra.mxu0 %v286
        %344 = vmatpush.msra.mxu0 %v284
        %345 = vmatpush.msra.mxu0 %v282
        %346 = vmatpush.msra.mxu0 %v280
        %347 = vmatpush.msra.mxu0 %v278
        %348 = vmatpush.msra.mxu0 %v276
        %349 = vmatmul.f32.gmra.mxu0 %v274
        %v350 = vpop.f32.mrf.mxu0
        %v351 = vadd.f32 %v310, %v350
        %352 = vdwg.mxu0
        %v353 = vmax.f32 %v331, 0.0
        %v354 = vmax.f32 %v351, 0.0
        %v355 = vld [vmem:[%s3] sm:$0xff]
        %v356 = vld [vmem:[%s3 + $0x8] sm:$0xff]
        %v357 = vld [vmem:[%s3 + $0x10] sm:$0xff]
        %v358 = vld [vmem:[%s3 + $0x18] sm:$0xff]
        %v359 = vld [vmem:[%s3 + $0x20] sm:$0xff]
        %v360 = vld [vmem:[%s3 + $0x28] sm:$0xff]
        %v361 = vld [vmem:[%s3 + $0x30] sm:$0xff]
        %v362 = vld [vmem:[%s3 + $0x38] sm:$0xff]
        %v363 = vld [vmem:[%s3 + $0x40] sm:$0xff]
        %v364 = vld [vmem:[%s3 + $0x48] sm:$0xff]
        %v365 = vld [vmem:[%s3 + $0x50] sm:$0xff]
        %v366 = vld [vmem:[%s3 + $0x58] sm:$0xff]
        %v367 = vld [vmem:[%s3 + $0x60] sm:$0xff]
        %v368 = vld [vmem:[%s3 + $0x68] sm:$0xff]
        %v369 = vld [vmem:[%s3 + $0x70] sm:$0xff]
        %v370 = vld [vmem:[%s3 + $0x78] sm:$0xff]
        %v371 = vld [vmem:[%s3 + $0x80] sm:$0xff]
        %v372 = vld [vmem:[%s3 + $0x88] sm:$0xff]
        %v373 = vld [vmem:[%s3 + $0x90] sm:$0xff]
        %v374 = vld [vmem:[%s3 + $0x98] sm:$0xff]
        %v375 = vld [vmem:[%s3 + $0xa0] sm:$0xff]
        %v376 = vld [vmem:[%s3 + $0xa8] sm:$0xff]
        %v377 = vld [vmem:[%s3 + $0xb0] sm:$0xff]
        %v378 = vld [vmem:[%s3 + $0xb8] sm:$0xff]
        %v379 = vld [vmem:[%s3 + $0xc0] sm:$0xff]
        %v380 = vld [vmem:[%s3 + $0xc8] sm:$0xff]
        %v381 = vld [vmem:[%s3 + $0xd0] sm:$0xff]
        %v382 = vld [vmem:[%s3 + $0xd8] sm:$0xff]
        %v383 = vld [vmem:[%s3 + $0xe0] sm:$0xff]
        %v384 = vld [vmem:[%s3 + $0xe8] sm:$0xff]
        %v385 = vld [vmem:[%s3 + $0xf0] sm:$0xff]
        %v386 = vld [vmem:[%s3 + $0xf8] sm:$0xff]
        %387 = vmatpush.msra.mxu0 %v370
        %388 = vmatpush.msra.mxu0 %v369
        %389 = vmatpush.msra.mxu0 %v368
        %390 = vmatpush.msra.mxu0 %v367
        %391 = vmatpush.msra.mxu0 %v366
        %392 = vmatpush.msra.mxu0 %v365
        %393 = vmatpush.msra.mxu0 %v364
        %394 = vmatpush.msra.mxu0 %v363
        %395 = vmatpush.msra.mxu0 %v362
        %396 = vmatpush.msra.mxu0 %v361
        %397 = vmatpush.msra.mxu0 %v360
        %398 = vmatpush.msra.mxu0 %v359
        %399 = vmatpush.msra.mxu0 %v358
        %400 = vmatpush.msra.mxu0 %v357
        %401 = vmatpush.msra.mxu0 %v356
        %402 = vmatpush.msra.mxu0 %v355
        %403 = vmatmul.f32.gmra.mxu0 %v353
        %v404 = vpop.f32.mrf.mxu0
        %v405 = vadd.f32 0.0, %v404
        %406 = vdwg.mxu0
        %407 = vmatpush.msra.mxu0 %v386
        %408 = vmatpush.msra.mxu0 %v385
        %409 = vmatpush.msra.mxu0 %v384
        %410 = vmatpush.msra.mxu0 %v383
        %411 = vmatpush.msra.mxu0 %v382
        %412 = vmatpush.msra.mxu0 %v381
        %413 = vmatpush.msra.mxu0 %v380
        %414 = vmatpush.msra.mxu0 %v379
        %415 = vmatpush.msra.mxu0 %v378
        %416 = vmatpush.msra.mxu0 %v377
        %417 = vmatpush.msra.mxu0 %v376
        %418 = vmatpush.msra.mxu0 %v375
        %419 = vmatpush.msra.mxu0 %v374
        %420 = vmatpush.msra.mxu0 %v373
        %421 = vmatpush.msra.mxu0 %v372
        %422 = vmatpush.msra.mxu0 %v371
        %423 = vmatmul.f32.gmra.mxu0 %v354
        %v424 = vpop.f32.mrf.mxu0
        %v425 = vadd.f32 %v405, %v424
        %426 = vdwg.mxu0
        %v427 = vadd.f32 %v274, %v425
        %v428 = vld [vmem:[%s4] sm:$0x1]
        %v430 = vperm.slane %v428, 0
        %v432 = vadd.f32 %v427, %v430
        %433 = vadd.xlane.f32.xlu0 %v432
        %v434 = vpop.xlane.xlu0 %433
        %v435 = vrcp.pop 128.0
        %v436 = vmul.f32 128.0, %v435
        %v437 = vsub.f32 1.0, %v436
        %v438 = vmul.f32 %v435, %v437
        %v439 = vadd.f32 %v435, %v438
        %vm440 = vweird.f32 %v435
        %v441 = vsel %vm440, %v435, %v439
        %v442 = vmul.f32 %v434, %v441
        %v443 = vsub.f32 %v432, %v442
        %v444 = vmul.f32 %v443, %v443
        %445 = vadd.xlane.f32.xlu0 %v444
        %v446 = vpop.xlane.xlu0 %445
        %v447 = vmul.f32 %v446, %v441
        %v448 = vadd.f32 %v447, 1e-05
        %v449 = vrsqrt.pop %v448
        %v450 = vmul.f32 %v449, %v448
        %v451 = vmul.f32 %v450, %v449
        %v452 = vmul.f32 0.5, %v451
        %v453 = vsub.f32 1.5, %v452
        %v454 = vmul.f32 %v449, %v453
        %vm455 = vweird.f32 %v448
        %vm456 = vweird.f32 %v449
        %vm457 = vmor %vm455, %vm456
        %v458 = vsel %vm457, %v449, %v454
        %v459 = vmul.f32 %v443, %v458
        %v460 = vld [vmem:[%s5] sm:$0x1]
        %v462 = vperm.slane %v460, 0
        %v464 = vmul.f32 %v459, %v462
        %v465 = vld [vmem:[%s6] sm:$0x1]
        %v467 = vperm.slane %v465, 0
        %v469 = vadd.f32 %v464, %v467
        %470 = vst [vmem:[%s269] sm:$0xff] %v469
        %s471 = sand.u32 %s181, 1
        %s472 = scalar_lea.sflag [#allocation3], %s471
        %s473 = sand.u32 %s181, 1
        %s474 = smul.addr %s473, 8
        %s475 = scalar_lea.vmem [#allocation2], %s474
        // Predicated region
        $region49: #{_ffn_layer_impl.1} parent=47 // pred_check
          %p476 = pneg %p191
        $region50: #{_ffn_layer_impl.1} parent=47 // pred_check_branch
          %478 = sbr.rel (%p476) target = $region52
        $region51: #{_ffn_layer_impl.1} parent=47 // pred_region
          %480 = vsyncadd %s472, 0
          %s481 = smul.addr %s21, 8
          %s482 = scalar_lea.hbm %s7, %s481
          %s484 = sshll.u32 %s475, 4
          %s485 = int_to_ptr.vmem [resolvable:$true] %s484
          %s486 = sshll.u32 %s482, 4
          %s487 = int_to_ptr.hbm [resolvable:$true] %s486
          %489 = dma.vmem_to_hbm [thread:$0]  %s485, 128, %s487, %s472
        $region52: #{_ffn_layer_impl.1} parent=47 // pred_fallthru
          _
      $region48: #{_ffn_layer_impl.1} parent=5 // pred_fallthru
        _
      %p490 = scmp.le.s32.totalorder 2, %s16
      // Predicated region
      $region53: #{_ffn_layer_impl.1} parent=5 // pred_check
        %p491 = pneg %p490
      $region54: #{_ffn_layer_impl.1} parent=5 // pred_check_branch
        %493 = sbr.rel (%p491) target = $region56
      $region55: #{_ffn_layer_impl.1} parent=5 // pred_region
        %s494 = ssub.s32 %s16, 2
        // Predicated region
        $region57: #{_ffn_layer_impl.1} parent=55 // pred_check
          %p495 = pneg %p197
        $region58: #{_ffn_layer_impl.1} parent=55 // pred_check_branch
          %497 = sbr.rel (%p495) target = $region60
        $region59: #{_ffn_layer_impl.1} parent=55 // pred_region
          %s498 = sand.u32 %s182, 1
          %s499 = scalar_lea.sflag [#allocation3], %s498
          %s500 = sand.u32 %s182, 1
          %s501 = smul.addr %s500, 8
          %s502 = scalar_lea.vmem [#allocation2], %s501
          %504 = dma.done %s499, 128
        $region60: #{_ffn_layer_impl.1} parent=55 // pred_fallthru
          _
      $region56: #{_ffn_layer_impl.1} parent=5 // pred_fallthru
        _
    $region6: #{_ffn_layer_impl.1} parent=1 // loop_footer
      %s20 = sadd.s32 1, %s16
    $region7: #{_ffn_layer_impl.1} parent=1 // loop_footer_branch
      %15 = sbr.rel target = $region3
    $region8: #{_ffn_layer_impl.1} parent=1 // loop_exit
      _
    %505 = vsyncpa [#allocation3], 1
    %s506 = scalar_lea.sflag [#allocation3], 1
    %507 = vsyncpa %s506, 1

</llo_original>
